<compile_context>
chip_gen: v7x
topology: tpu7x:2x2x1
jax: 0.10.0
libtpu: 0.0.40
codegen_flags: <defaults>
</compile_context>

<pallas_src>
import functools

import jax
import jax.numpy as jnp
from jax.experimental import pallas as pl
from jax.experimental.pallas import tpu as pltpu


_LANES = 128
_SUBLANES = 8


def _round_up(x, m):
    return ((x + m - 1) // m) * m


def _rgb_bg_kernel(pred_ref, tgt_ref, lam_ref, out_ref, acc_err, acc_log, *,
                   n_rays, n_feat, tile_cols, blocks_per_core, use_l1,
                   need_mask, approx_reciprocal):
    c = pl.program_id(0)          # column-range split ("parallel", -> 2 TCs on v7x)
    j = pl.program_id(1)          # column block within the split ("arbitrary")

    @pl.when(j == 0)
    def _init():
        acc_err[...] = jnp.zeros_like(acc_err)
        acc_log[...] = jnp.zeros_like(acc_log)

    p = pred_ref[...].astype(jnp.float32)            # (D, tile_cols), lane-dense
    t = tgt_ref[...].astype(jnp.float32)
    diff = p - t
    err = jnp.abs(diff) if use_l1 else diff * diff

    lam = lam_ref[...].astype(jnp.float32)           # (1, tile_cols)

    valid = None
    if need_mask:
        lane = jax.lax.broadcasted_iota(jnp.int32, (1, tile_cols), 1)
        col0 = (c * blocks_per_core + j) * tile_cols  # unclamped global column
        valid = (col0 + lane) < n_rays
        # Keep log()/reciprocal() finite on padded lanes; log(1) == 0, so the
        # log term needs no further masking.
        lam = jnp.where(valid, lam, 1.0)

    w = pl.reciprocal(1.0 + lam, approx=approx_reciprocal)   # EUP slot
    logl = jnp.log(lam)                                      # EUP slot

    contrib = err * w            # per-ray weight broadcasts over the D sublanes

    if need_mask:
        contrib = jnp.where(valid, contrib, 0.0)

    # Per-step reduction to two scalars; resident accumulators are one vreg
    # each, so there is no O(block) scratch traffic per step.
    acc_err[...] += jnp.sum(contrib)
    acc_log[...] += jnp.sum(logl)

    @pl.when(j == pl.num_programs(1) - 1)
    def _finalize():
        out_ref[...] = (acc_err[...] * (1.0 / (n_rays * n_feat))
                        + acc_log[...] * (1.0 / n_rays))


def rgb_with_background_loss(outputs, targets, lambda_bg, *, use_l1,
                             max_tile_cols=None, approx_reciprocal=False):
    """Scalar float32 loss matching the torch module's semantics.

    lambda_bg must be broadcastable to outputs.shape[:-1] (scalar, per-ray, or
    per-batch); mean(log(lambda_bg)) is invariant under that broadcast.
    """
    outputs = jnp.asarray(outputs)
    targets = jnp.asarray(targets)
    lambda_bg = jnp.asarray(lambda_bg)
    if outputs.shape != targets.shape:
        raise ValueError("outputs/targets shape mismatch")

    lead = outputs.shape[:-1]
    n_feat = int(outputs.shape[-1])
    n_rays = 1
    for s in lead:
        n_rays *= int(s)

    # Channel-major, lane-dense presentation: (D, N) big tensors, (1, N) lambda.
    pred_cm = outputs.reshape(n_rays, n_feat).T
    tgt_cm = targets.reshape(n_rays, n_feat).T
    lam_row = jnp.broadcast_to(lambda_bg, lead).reshape(1, n_rays)

    # ---- Column-tile sizing, budgeted by *padded* VMEM bytes ----------------
    # Per block column, sublane padding makes each stream cost ~32 B/col
    # regardless of dtype (f32: D->8 rows x 4 B; bf16: D->16 rows x 2 B), and
    # lambda pads 1->8 rows.  Two pipeline buffers per stream.
    pad_rows = _round_up(max(n_feat, 1), _SUBLANES)
    bytes_per_col = (2 * pad_rows + _SUBLANES) * 4           # pred + tgt + lam
    vmem_budget = 24 << 20                                   # double-buffered streams
    tile_cols = vmem_budget // (2 * bytes_per_col)
    tile_cols = max(_LANES, (tile_cols // _LANES) * _LANES)
    if max_tile_cols is not None:
        tile_cols = min(tile_cols,
                        max(_LANES, (int(max_tile_cols) // _LANES) * _LANES))

    if n_rays <= tile_cols:
        tile_cols = max(n_rays, 1)        # one block == full dim (always legal)
        n_col_blocks = 1
    else:
        n_col_blocks = (n_rays + tile_cols - 1) // tile_cols

    # Two-way column split: both v7x TensorCores; sequential (harmless) on the
    # single-core generations.
    num_splits = 2 if n_col_blocks >= 2 else 1
    blocks_per_core = (n_col_blocks + num_splits - 1) // num_splits
    need_mask = (num_splits * blocks_per_core * tile_cols != n_rays)

    def col_block(c, j):
        # Clamp the (rare) overhanging step when the block count is odd; that
        # step's contribution is fully masked in-kernel.
        return jnp.minimum(c * blocks_per_core + j, n_col_blocks - 1)

    kernel = functools.partial(
        _rgb_bg_kernel,
        n_rays=int(n_rays), n_feat=int(n_feat), tile_cols=int(tile_cols),
        blocks_per_core=int(blocks_per_core), use_l1=bool(use_l1),
        need_mask=bool(need_mask), approx_reciprocal=bool(approx_reciprocal),
    )

    vmem_est = 2 * bytes_per_col * tile_cols
    vmem_limit = int(min(64 << 20, max(32 << 20, vmem_est + (4 << 20))))

    cost = pl.CostEstimate(
        flops=4 * n_rays * n_feat + 6 * n_rays,
        transcendentals=2 * n_rays,
        bytes_accessed=(2 * n_rays * n_feat * pred_cm.dtype.itemsize
                        + n_rays * lam_row.dtype.itemsize
                        + num_splits * _SUBLANES * _LANES * 4),
    )

    out = pl.pallas_call(
        kernel,
        out_shape=jax.ShapeDtypeStruct((num_splits * _SUBLANES, _LANES),
                                       jnp.float32),
        grid_spec=pltpu.PrefetchScalarGridSpec(
            num_scalar_prefetch=0,
            grid=(int(num_splits), int(blocks_per_core)),
            in_specs=[
                pl.BlockSpec((n_feat, tile_cols),
                             lambda c, j: (0, col_block(c, j))),
                pl.BlockSpec((n_feat, tile_cols),
                             lambda c, j: (0, col_block(c, j))),
                pl.BlockSpec((1, tile_cols),
                             lambda c, j: (0, col_block(c, j))),
            ],
            out_specs=pl.BlockSpec((_SUBLANES, _LANES), lambda c, j: (c, 0)),
            scratch_shapes=[
                pltpu.VMEM((_SUBLANES, _LANES), jnp.float32),   # acc_err
                pltpu.VMEM((_SUBLANES, _LANES), jnp.float32),   # acc_log
            ],
        ),
        compiler_params=pltpu.CompilerParams(
            dimension_semantics=("parallel", "arbitrary"),
            vmem_limit_bytes=vmem_limit),
        cost_estimate=cost,
    )(pred_cm, tgt_cm, lam_row)

    # One partial per core, replicated across its (8,128) output tile.
    return jnp.sum(out[0::_SUBLANES, 0])


class RGBWithBackground:
    """JAX/Pallas port of the PyTorch RGBWithBackground loss module."""

    def __init__(self, conf):
        if hasattr(conf, "get_bool"):
            use_l1 = bool(conf.get_bool("use_l1"))
        elif isinstance(conf, dict):
            use_l1 = bool(conf.get("use_l1", False))
        else:
            use_l1 = bool(conf)
        self.use_l1 = use_l1

    def __call__(self, outputs, targets, lambda_bg):
        return rgb_with_background_loss(outputs, targets, lambda_bg,
                                        use_l1=self.use_l1)

    forward = __call__


def _reference(outputs, targets, lambda_bg, use_l1):
    o = jnp.asarray(outputs, jnp.float32)
    t = jnp.asarray(targets, jnp.float32)
    l = jnp.asarray(lambda_bg, jnp.float32)
    err = jnp.abs(o - t) if use_l1 else (o - t) ** 2
    weighted = jnp.mean(err, -1) / (1.0 + l)
    return jnp.mean(weighted) + jnp.mean(jnp.log(l))


if __name__ == "__main__":
    key = jax.random.PRNGKey(0)
    k1, k2, k3, k4, k5, k6, k7, k8, k9 = jax.random.split(key, 9)

    # batch=2, rays=64, rgb=3; lambda_bg per ray, strictly positive.
    outputs = jax.random.uniform(k1, (2, 64, 3), dtype=jnp.float32)
    targets = jax.random.uniform(k2, (2, 64, 3), dtype=jnp.float32)
    lambda_bg = jax.random.uniform(k3, (2, 64), dtype=jnp.float32,
                                   minval=0.1, maxval=1.0)

    # MSE variant (use_l1 = False).
    mod_mse = RGBWithBackground({"use_l1": False})
    loss_mse = jax.block_until_ready(mod_mse(outputs, targets, lambda_bg))
    ref_mse = _reference(outputs, targets, lambda_bg, use_l1=False)
    assert jnp.allclose(loss_mse, ref_mse, rtol=1e-5, atol=1e-5), (loss_mse, ref_mse)

    # L1 variant.
    mod_l1 = RGBWithBackground({"use_l1": True})
    loss_l1 = jax.block_until_ready(mod_l1(outputs, targets, lambda_bg))
    ref_l1 = _reference(outputs, targets, lambda_bg, use_l1=True)
    assert jnp.allclose(loss_l1, ref_l1, rtol=1e-5, atol=1e-5), (loss_l1, ref_l1)

    # Ragged ray count with a single full-extent block (N = 120, no mask).
    o3 = jax.random.uniform(k4, (3, 40, 3), dtype=jnp.float32)
    t3 = jax.random.uniform(k5, (3, 40, 3), dtype=jnp.float32)
    l3 = jax.random.uniform(k6, (3, 40), dtype=jnp.float32, minval=0.2, maxval=1.2)
    loss3 = jax.block_until_ready(
        rgb_with_background_loss(o3, t3, l3, use_l1=False))
    ref3 = _reference(o3, t3, l3, use_l1=False)
    assert jnp.allclose(loss3, ref3, rtol=1e-5, atol=1e-5), (loss3, ref3)

    # Multi-block path: N = 1250 rays with 256-column tiles -> 5 column blocks,
    # 2-way "parallel" split (odd block count exercises the clamped overhang
    # step) plus a partial last block (exercises the in-kernel lane mask).
    o4 = jax.random.uniform(k7, (5, 250, 3), dtype=jnp.float32)
    t4 = jax.random.uniform(k8, (5, 250, 3), dtype=jnp.float32)
    l4 = jax.random.uniform(k9, (5, 250), dtype=jnp.float32, minval=0.1, maxval=1.5)
    loss4 = jax.block_until_ready(
        rgb_with_background_loss(o4, t4, l4, use_l1=False, max_tile_cols=256))
    ref4 = _reference(o4, t4, l4, use_l1=False)
    assert jnp.allclose(loss4, ref4, rtol=1e-5, atol=1e-5), (loss4, ref4)

    # bf16 inputs stay bf16 in HBM (cast to f32 happens in-kernel).
    o5 = outputs.astype(jnp.bfloat16)
    t5 = targets.astype(jnp.bfloat16)
    loss5 = jax.block_until_ready(mod_mse(o5, t5, lambda_bg))
    ref5 = _reference(o5, t5, lambda_bg, use_l1=False)
    assert jnp.allclose(loss5, ref5, rtol=1e-5, atol=1e-5), (loss5, ref5)

    print("KERNEL_OK")
</pallas_src>

<mosaic_0001>
module attributes {stable_mosaic.version = 11 : i64} {
  func.func @_rgb_bg_kernel(%arg0: i32, %arg1: i32, %arg2: memref<3x128xf32, #tpu.memory_space<vmem>>, %arg3: memref<3x128xf32, #tpu.memory_space<vmem>>, %arg4: memref<1x128xf32, #tpu.memory_space<vmem>>, %arg5: memref<8x128xf32, #tpu.memory_space<vmem>>, %arg6: memref<8x128xf32, #tpu.memory_space<vmem>>, %arg7: memref<8x128xf32, #tpu.memory_space<vmem>>) attributes {dimension_semantics = [#tpu.dimension_semantics<parallel>, #tpu.dimension_semantics<arbitrary>], iteration_bounds = array<i64: 1, 1>, scalar_prefetch = 0 : i64, scratch_operands = 2 : i64, tpu.core_type = #tpu.core_type<tc>, window_params = [{transform_indices = @transform_0, window_bounds = array<i64: 3, 128>}, {transform_indices = @transform_1, window_bounds = array<i64: 3, 128>}, {transform_indices = @transform_2, window_bounds = array<i64: 1, 128>}, {transform_indices = @transform_3, window_bounds = array<i64: 8, 128>}]} {
    %c0_i32 = arith.constant 0 : i32
    %0 = arith.cmpi eq, %arg1, %c0_i32 : i32
    %1 = arith.extui %0 : i1 to i32
    %c0_i32_0 = arith.constant 0 : i32
    %2 = arith.cmpi ne, %1, %c0_i32_0 : i32
    scf.if %2 {
      %cst_18 = arith.constant 0.000000e+00 : f32
      %33 = vector.broadcast %cst_18 : f32 to vector<8x128xf32>
      %c0_19 = arith.constant 0 : index
      %c0_20 = arith.constant 0 : index
      %34 = vector.load %arg6[%c0_19, %c0_20] : memref<8x128xf32, #tpu.memory_space<vmem>>, vector<8x128xf32>
      tpu.vector_store %arg6[%c0_19, %c0_20], %33 {strides = array<i32>} : memref<8x128xf32, #tpu.memory_space<vmem>>, vector<8x128xf32>,
      %cst_21 = arith.constant 0.000000e+00 : f32
      %35 = vector.broadcast %cst_21 : f32 to vector<8x128xf32>
      %c0_22 = arith.constant 0 : index
      %c0_23 = arith.constant 0 : index
      %36 = vector.load %arg7[%c0_22, %c0_23] : memref<8x128xf32, #tpu.memory_space<vmem>>, vector<8x128xf32>
      tpu.vector_store %arg7[%c0_22, %c0_23], %35 {strides = array<i32>} : memref<8x128xf32, #tpu.memory_space<vmem>>, vector<8x128xf32>,
    } else {
    }
    %c0 = arith.constant 0 : index
    %c0_1 = arith.constant 0 : index
    %3 = vector.load %arg2[%c0, %c0_1] : memref<3x128xf32, #tpu.memory_space<vmem>>, vector<3x128xf32>
    %c0_2 = arith.constant 0 : index
    %c0_3 = arith.constant 0 : index
    %4 = vector.load %arg3[%c0_2, %c0_3] : memref<3x128xf32, #tpu.memory_space<vmem>>, vector<3x128xf32>
    %5 = arith.subf %3, %4 : vector<3x128xf32>
    %6 = arith.mulf %5, %5 : vector<3x128xf32>
    %c0_4 = arith.constant 0 : index
    %c0_5 = arith.constant 0 : index
    %7 = vector.load %arg4[%c0_4, %c0_5] : memref<1x128xf32, #tpu.memory_space<vmem>>, vector<1x128xf32>
    %cst = arith.constant 1.000000e+00 : f32
    %8 = vector.broadcast %cst : f32 to vector<1x128xf32>
    %9 = arith.addf %8, %7 : vector<1x128xf32>
    %10 = tpu.reciprocal %9 : vector<1x128xf32> -> vector<1x128xf32>
    %11 = math.log %7 : vector<1x128xf32>
    %12 = vector.broadcast %10 : vector<1x128xf32> to vector<3x128xf32>
    %13 = arith.mulf %6, %12 : vector<3x128xf32>
    %c0_6 = arith.constant 0 : index
    %c0_7 = arith.constant 0 : index
    %14 = vector.load %arg6[%c0_6, %c0_7] : memref<8x128xf32, #tpu.memory_space<vmem>>, vector<8x128xf32>
    %15 = vector.shape_cast %13 : vector<3x128xf32> to vector<1x3x128xf32>
    %cst_8 = arith.constant dense<0.000000e+00> : vector<1xf32>
    %16 = vector.multi_reduction <add>, %15, %cst_8 [1, 2] : vector<1x3x128xf32> to vector<1xf32>
    %17 = vector.shape_cast %16 : vector<1xf32> to vector<1x1x1xf32>
    %18 = vector.extract %17[0, 0, 0] : f32 from vector<1x1x1xf32>
    %19 = vector.broadcast %18 : f32 to vector<8x128xf32>
    %20 = arith.addf %14, %19 : vector<8x128xf32>
    %c0_9 = arith.constant 0 : index
    %c0_10 = arith.constant 0 : index
    %21 = vector.load %arg6[%c0_9, %c0_10] : memref<8x128xf32, #tpu.memory_space<vmem>>, vector<8x128xf32>
    tpu.vector_store %arg6[%c0_9, %c0_10], %20 {strides = array<i32>} : memref<8x128xf32, #tpu.memory_space<vmem>>, vector<8x128xf32>,
    %c0_11 = arith.constant 0 : index
    %c0_12 = arith.constant 0 : index
    %22 = vector.load %arg7[%c0_11, %c0_12] : memref<8x128xf32, #tpu.memory_space<vmem>>, vector<8x128xf32>
    %23 = vector.shape_cast %11 : vector<1x128xf32> to vector<1x1x128xf32>
    %cst_13 = arith.constant dense<0.000000e+00> : vector<1xf32>
    %24 = vector.multi_reduction <add>, %23, %cst_13 [1, 2] : vector<1x1x128xf32> to vector<1xf32>
    %25 = vector.shape_cast %24 : vector<1xf32> to vector<1x1x1xf32>
    %26 = vector.extract %25[0, 0, 0] : f32 from vector<1x1x1xf32>
    %27 = vector.broadcast %26 : f32 to vector<8x128xf32>
    %28 = arith.addf %22, %27 : vector<8x128xf32>
    %c0_14 = arith.constant 0 : index
    %c0_15 = arith.constant 0 : index
    %29 = vector.load %arg7[%c0_14, %c0_15] : memref<8x128xf32, #tpu.memory_space<vmem>>, vector<8x128xf32>
    tpu.vector_store %arg7[%c0_14, %c0_15], %28 {strides = array<i32>} : memref<8x128xf32, #tpu.memory_space<vmem>>, vector<8x128xf32>,
    %c0_i32_16 = arith.constant 0 : i32
    %30 = arith.cmpi eq, %arg1, %c0_i32_16 : i32
    %31 = arith.extui %30 : i1 to i32
    %c0_i32_17 = arith.constant 0 : i32
    %32 = arith.cmpi ne, %31, %c0_i32_17 : i32
    scf.if %32 {
      %c0_18 = arith.constant 0 : index
      %c0_19 = arith.constant 0 : index
      %33 = vector.load %arg6[%c0_18, %c0_19] : memref<8x128xf32, #tpu.memory_space<vmem>>, vector<8x128xf32>
      %cst_20 = arith.constant 0.00260416674 : f32
      %34 = vector.broadcast %cst_20 : f32 to vector<8x128xf32>
      %35 = arith.mulf %33, %34 : vector<8x128xf32>
      %c0_21 = arith.constant 0 : index
      %c0_22 = arith.constant 0 : index
      %36 = vector.load %arg7[%c0_21, %c0_22] : memref<8x128xf32, #tpu.memory_space<vmem>>, vector<8x128xf32>
      %cst_23 = arith.constant 7.812500e-03 : f32
      %37 = vector.broadcast %cst_23 : f32 to vector<8x128xf32>
      %38 = arith.mulf %36, %37 : vector<8x128xf32>
      %39 = arith.addf %35, %38 : vector<8x128xf32>
      %c0_24 = arith.constant 0 : index
      %c0_25 = arith.constant 0 : index
      %40 = vector.load %arg5[%c0_24, %c0_25] : memref<8x128xf32, #tpu.memory_space<vmem>>, vector<8x128xf32>
      tpu.vector_store %arg5[%c0_24, %c0_25], %39 {strides = array<i32>} : memref<8x128xf32, #tpu.memory_space<vmem>>, vector<8x128xf32>,
    } else {
    }
    return
  }
  func.func @transform_0(%arg0: i32, %arg1: i32) -> (i32, i32) {
    %c1_i32 = arith.constant 1 : i32
    %0 = arith.muli %arg0, %c1_i32 : i32
    %1 = arith.addi %0, %arg1 : i32
    %c0_i32 = arith.constant 0 : i32
    %2 = arith.minsi %1, %c0_i32 : i32
    %c0_i32_0 = arith.constant 0 : i32
    %c0_i32_1 = arith.constant 0 : i32
    return %c0_i32_0, %2 : i32, i32
  }
  func.func @transform_1(%arg0: i32, %arg1: i32) -> (i32, i32) {
    %c1_i32 = arith.constant 1 : i32
    %0 = arith.muli %arg0, %c1_i32 : i32
    %1 = arith.addi %0, %arg1 : i32
    %c0_i32 = arith.constant 0 : i32
    %2 = arith.minsi %1, %c0_i32 : i32
    %c0_i32_0 = arith.constant 0 : i32
    %c0_i32_1 = arith.constant 0 : i32
    return %c0_i32_0, %2 : i32, i32
  }
  func.func @transform_2(%arg0: i32, %arg1: i32) -> (i32, i32) {
    %c1_i32 = arith.constant 1 : i32
    %0 = arith.muli %arg0, %c1_i32 : i32
    %1 = arith.addi %0, %arg1 : i32
    %c0_i32 = arith.constant 0 : i32
    %2 = arith.minsi %1, %c0_i32 : i32
    %c0_i32_0 = arith.constant 0 : i32
    %c0_i32_1 = arith.constant 0 : i32
    return %c0_i32_0, %2 : i32, i32
  }
  func.func @transform_3(%arg0: i32, %arg1: i32) -> (i32, i32) {
    %c0_i32 = arith.constant 0 : i32
    %c0_i32_0 = arith.constant 0 : i32
    return %arg0, %c0_i32 : i32, i32
  }
}

</mosaic_0001>

<llo_original>
// kernel: tpu_custom_call.1
$region0: #{tpu_custom_call.1}
  #allocation0 [shape = 'u32[]', space=smem, size = 0x4, offset = 0x4, fixed_abs, tag = 'smem constant byte address 0x4 - core index']
  #allocation1 [shape = 'u32[144,128]{1,0:T(1,128)}', space=vmem, size = 0x12000, scoped, tag = 'internal scratch']
  #allocation2 [shape = 'f32[8,128]{1,0:T(8,128)}', space=vmem, size = 0x1000, scoped, tag = 'scratch operand']
  #allocation3 [shape = 'f32[8,128]{1,0:T(8,128)}', space=vmem, size = 0x1000, scoped, tag = 'scratch operand']
  %s0 = inlined_call_operand.hbm [shape: f32[3,128], index: 0, kind: input, shape index: {}]
  %s1 = inlined_call_operand.hbm [shape: f32[3,128], index: 1, kind: input, shape index: {}]
  %s2 = inlined_call_operand.vmem [shape: f32[1,128], index: 2, kind: input, shape index: {}]
  %s3 = inlined_call_operand.hbm [shape: f32[8,128], index: 3, kind: output, shape index: {}]
  %s4 = sld [smem:[#allocation0]]
  $region38: #{tpu_custom_call.1} parent=0
    _
  %s6 = ssub.s32 1, %s4
  %s7 = scalar_select 0, %s6, %s4
  $region1: #{tpu_custom_call.1} parent=0
    #allocation4 [shape = 'u8[2048]{0}', space=vmem, size = 0x800, scoped, tag = 'input window, operand 0, single buffered']
    #allocation5 [shape = 's32[1]{0}', space=sflag, size = 0x4, scoped, tag = 'scoped memory for tpu_custom_call.1']
    #allocation6 [shape = 's32[1]{0}', space=sflag, size = 0x4, scoped, tag = 'scoped memory for tpu_custom_call.1']
    #allocation7 [shape = 'u8[2048]{0}', space=vmem, size = 0x800, scoped, tag = 'input window, operand 1, single buffered']
    #allocation8 [shape = 's32[1]{0}', space=sflag, size = 0x4, scoped, tag = 'scoped memory for tpu_custom_call.1']
    #allocation9 [shape = 'u8[4096]{0}', space=vmem, size = 0x1000, scoped, tag = 'output window, operand 0, single buffered']
    %8 = vsyncpa [#allocation5], 0
    %9 = vsyncpa [#allocation8], 0
    %10 = vsyncpa [#allocation6], 0
    // Predicated region
    $region2: #{tpu_custom_call.1} parent=1 // pred_check
      _
    $region3: #{tpu_custom_call.1} parent=1 // pred_check_branch
      %12 = sbr.rel (0) target = $region5
    $region4: #{tpu_custom_call.1} parent=1 // pred_region
      %s13 = sadd.s32 0, 0
      %p14 = scmp.lt.s32.totalorder %s13, 0
      %s15 = scalar_select %p14, %s13, 0
      %s17 = ssub.s32 64, 64
      %18 = vsyncadd [#allocation5], %s17
      %s19 = smul.addr %s15, 64
      %s20 = scalar_lea.hbm %s0, %s19
      %s22 = sshll.u32 [#allocation4], 4
      %s23 = int_to_ptr.vmem [resolvable:$true] %s22
      %25 = dma.hbm_to_vmem [thread:$0]  %s20, 64, %s23, [#allocation5]
    $region5: #{tpu_custom_call.1} parent=1 // pred_fallthru
      _
    // Predicated region
    $region6: #{tpu_custom_call.1} parent=1 // pred_check
      _
    $region7: #{tpu_custom_call.1} parent=1 // pred_check_branch
      %27 = sbr.rel (0) target = $region9
    $region8: #{tpu_custom_call.1} parent=1 // pred_region
      %s28 = sadd.s32 0, 0
      %p29 = scmp.lt.s32.totalorder %s28, 0
      %s30 = scalar_select %p29, %s28, 0
      %s32 = ssub.s32 64, 64
      %33 = vsyncadd [#allocation8], %s32
      %s34 = smul.addr %s30, 64
      %s35 = scalar_lea.hbm %s1, %s34
      %s37 = sshll.u32 [#allocation7], 4
      %s38 = int_to_ptr.vmem [resolvable:$true] %s37
      %40 = dma.hbm_to_vmem [thread:$0]  %s35, 64, %s38, [#allocation8]
    $region9: #{tpu_custom_call.1} parent=1 // pred_fallthru
      _
    // Predicated region
    $region10: #{tpu_custom_call.1} parent=1 // pred_check
      _
    $region11: #{tpu_custom_call.1} parent=1 // pred_check_branch
      %42 = sbr.rel (0) target = $region13
    $region12: #{tpu_custom_call.1} parent=1 // pred_region
      %s43 = sadd.s32 0, 0
      %p44 = scmp.lt.s32.totalorder %s43, 0
      %s45 = scalar_select %p44, %s43, 0
      %p46 = scmp.lt.s32.totalorder %s45, 0
      %s47 = scalar_select %p46, %s45, 0
      %s48 = scalar_lea.vmem %s2, %s47
      %s49 = sadd.s32 0, 0
      %p50 = scmp.lt.s32.totalorder %s49, 0
      %s51 = scalar_select %p50, %s49, 0
    $region13: #{tpu_custom_call.1} parent=1 // pred_fallthru
      _
    // Predicated region
    $region14: #{tpu_custom_call.1} parent=1 // pred_check
      _
    $region15: #{tpu_custom_call.1} parent=1 // pred_check_branch
      %53 = sbr.rel (0) target = $region17
    $region16: #{tpu_custom_call.1} parent=1 // pred_region
      %54 = dma.done [#allocation5], 64
    $region17: #{tpu_custom_call.1} parent=1 // pred_fallthru
      _
    // Predicated region
    $region18: #{tpu_custom_call.1} parent=1 // pred_check
      _
    $region19: #{tpu_custom_call.1} parent=1 // pred_check_branch
      %56 = sbr.rel (0) target = $region21
    $region20: #{tpu_custom_call.1} parent=1 // pred_region
      %57 = dma.done [#allocation8], 64
    $region21: #{tpu_custom_call.1} parent=1 // pred_fallthru
      _
    %s58 = sadd.s32 0, 0
    %p59 = scmp.lt.s32.totalorder %s58, 0
    %s60 = scalar_select %p59, %s58, 0
    %p61 = scmp.lt.s32.totalorder %s60, 0
    %s62 = scalar_select %p61, %s60, 0
    %s63 = scalar_lea.vmem %s2, %s62
    %s64 = sadd.s32 0, 0
    %p65 = scmp.lt.s32.totalorder %s64, 0
    %s66 = scalar_select %p65, %s64, 0
    %s67 = sadd.s32 0, 0
    %p68 = scmp.lt.s32.totalorder %s67, 0
    %s69 = scalar_select %p68, %s67, 0
    %s70 = sadd.s32 0, 0
    %p71 = scmp.lt.s32.totalorder %s70, 0
    %s72 = scalar_select %p71, %s70, 0
    %p73 = scmp.lt.s32.totalorder %s72, 0
    %s74 = scalar_select %p73, %s72, 0
    %s75 = scalar_lea.vmem %s2, %s74
    %s76 = sadd.s32 0, 0
    %p77 = scmp.lt.s32.totalorder %s76, 0
    %s78 = scalar_select %p77, %s76, 0
    %p79 = scmp.eq.s32.totalorder 0, 0
    // Predicated region
    $region22: #{tpu_custom_call.1} parent=1 // pred_check
      %p80 = pneg %p79
    $region23: #{tpu_custom_call.1} parent=1 // pred_check_branch
      %82 = sbr.rel (%p80) target = $region25
    $region24: #{tpu_custom_call.1} parent=1 // pred_region
      %83 = vst [vmem:[#allocation2] sm:$0xff] 0.0
      %84 = vst [vmem:[#allocation3] sm:$0xff] 0.0
    $region25: #{tpu_custom_call.1} parent=1 // pred_fallthru
      _
    %v85 = vld [vmem:[#allocation4] sm:$0x7]
    %v86 = vld [vmem:[#allocation7] sm:$0x7]
    %v87 = vsub.f32 %v85, %v86
    %v88 = vmul.f32 %v87, %v87
    %v89 = vld [vmem:[%s75] sm:$0x1]
    %v90 = vadd.f32 %v89, 1.0
    %v91 = vrcp.pop %v90
    %v92 = vlog2.pop %v89
    %v93 = vmul.f32 %v92, 0.6931472
    %v95 = vlaneseq
    %v96 = vshrl.u32 %v95, 7
    %v97 = vsub.s32 0, %v96
    %v98 = vrot.slane %v91, %v97
    %v100 = vmul.f32 %v88, %v98
    %v101 = vld [vmem:[#allocation2] sm:$0xff]
    %vm102 = vcmask 1042432
    %v103 = vsel %vm102, %v100, 0.0
    %104 = vadd.xlane.f32.xlu0 %v103
    %v105 = vpop.xlane.xlu0 %104
    %v106 = vrot.slane %v105, 4
    %v107 = vadd.f32 %v105, %v106
    %v108 = vrot.slane %v107, 2
    %v109 = vadd.f32 %v107, %v108
    %v110 = vrot.slane %v109, 1
    %v111 = vadd.f32 %v109, %v110
    %s112 = vtos %v111
    %v113 = vstv %s112
    %v114 = vadd.f32 %v101, %v113
    %115 = vst [vmem:[#allocation2] sm:$0xff] %v114
    %v116 = vld [vmem:[#allocation3] sm:$0xff]
    %vm117 = vcmask 1040384
    %v118 = vsel %vm117, %v93, 0.0
    %119 = vadd.xlane.f32.xlu0 %v118
    %v120 = vpop.xlane.xlu0 %119
    %v121 = vrot.slane %v120, 4
    %v122 = vadd.f32 %v120, %v121
    %v123 = vrot.slane %v122, 2
    %v124 = vadd.f32 %v122, %v123
    %v125 = vrot.slane %v124, 1
    %v126 = vadd.f32 %v124, %v125
    %s127 = vtos %v126
    %v128 = vstv %s127
    %v129 = vadd.f32 %v116, %v128
    %130 = vst [vmem:[#allocation3] sm:$0xff] %v129
    // Predicated region
    $region26: #{tpu_custom_call.1} parent=1 // pred_check
      %p131 = pneg %p79
    $region27: #{tpu_custom_call.1} parent=1 // pred_check_branch
      %133 = sbr.rel (%p131) target = $region29
    $region28: #{tpu_custom_call.1} parent=1 // pred_region
      %v134 = vld [vmem:[#allocation2] sm:$0xff]
      %v135 = vmul.f32 %v134, 0.0026041667
      %v136 = vld [vmem:[#allocation3] sm:$0xff]
      %v137 = vmul.f32 %v136, 0.0078125
      %v138 = vadd.f32 %v135, %v137
      %139 = vst [vmem:[#allocation9] sm:$0xff] %v138
    $region29: #{tpu_custom_call.1} parent=1 // pred_fallthru
      _
    // Predicated region
    $region30: #{tpu_custom_call.1} parent=1 // pred_check
      _
    $region31: #{tpu_custom_call.1} parent=1 // pred_check_branch
      %141 = sbr.rel (0) target = $region33
    $region32: #{tpu_custom_call.1} parent=1 // pred_region
      %s143 = ssub.s32 128, 128
      %144 = vsyncadd [#allocation6], %s143
      %s146 = sshll.u32 [#allocation9], 4
      %s147 = int_to_ptr.vmem [resolvable:$true] %s146
      %149 = dma.vmem_to_hbm [thread:$0]  %s147, 128, %s3, [#allocation6]
    $region33: #{tpu_custom_call.1} parent=1 // pred_fallthru
      _
    // Predicated region
    $region34: #{tpu_custom_call.1} parent=1 // pred_check
      _
    $region35: #{tpu_custom_call.1} parent=1 // pred_check_branch
      %151 = sbr.rel (0) target = $region37
    $region36: #{tpu_custom_call.1} parent=1 // pred_region
      %152 = dma.done [#allocation6], 128
    $region37: #{tpu_custom_call.1} parent=1 // pred_fallthru
      _
    %153 = vsyncpa [#allocation5], 1
    %154 = vsyncpa [#allocation8], 1
    %155 = vsyncpa [#allocation6], 1

</llo_original>
